<compile_context>
chip_gen: v5e
topology: v5e:2x2
jax: 0.10.0
libtpu: 0.0.40
codegen_flags: <defaults>
</compile_context>

<pallas_src>
import jax
import jax.numpy as jnp
from jax import lax
from jax.experimental import pallas as pl
from jax.experimental.pallas import tpu as pltpu


def _round_up(x, m):
    return (x + m - 1) // m * m


def _reduce_kernel(x_ref, t_ref, w_ref, out_ref):
    # x_ref: (1, C, TP)  t_ref: (1, C, TP)  w_ref: (1, 1, TP)
    # out_ref: (1, C+1, C+1) f32 — resident accumulator across the pixel axis.
    p = pl.program_id(1)

    @pl.when(p == 0)
    def _():
        out_ref[...] = jnp.zeros_like(out_ref)

    x = x_ref[0].astype(jnp.float32)            # (C, TP)
    t = t_ref[0].astype(jnp.float32)            # (C, TP)
    w = w_ref[0].astype(jnp.float32)            # (1, TP)

    xw = x * w                                  # weighted input rows
    ones = jnp.ones_like(w)                     # (1, TP)
    x_aug = jnp.concatenate([xw, w], axis=0)    # (C+1, TP)
    t_aug = jnp.concatenate([t, ones], axis=0)  # (C+1, TP)

    # Single MXU matmul contracting the last (pixel) axis of both operands.
    partial = lax.dot_general(
        x_aug, t_aug,
        dimension_numbers=(((1,), (1,)), ((), ())),
        preferred_element_type=jnp.float32)     # (C+1, C+1)

    out_ref[0] += partial


def dice_reductions(inp, tgt, w, *, vmem_budget_bytes=12 * 1024 * 1024):
    """inp, tgt: (N, C, P); w: (N, 1, P).  Returns aug: (N, C+1, C+1) f32 with
       aug[n, :C, :C] = sum_p inp*tgt*w,  aug[n, :C, C] = sum_p inp*w,
       aug[n, C, :C]  = sum_p tgt*w."""
    N, C, P = inp.shape
    C1 = C + 1

    # Pick a pixel tile from a VMEM budget (double-buffered x, t, w blocks),
    # sized to fit comfortably on v7x (64 MiB VMEM) as well as v5e/v6e.
    itemsize = max(inp.dtype.itemsize, tgt.dtype.itemsize, w.dtype.itemsize)
    c_pad = _round_up(C, 8)
    per_col = (2 * c_pad + 8) * itemsize * 2       # x, t, w blocks, x2 pipeline bufs
    tp = (vmem_budget_bytes // per_col // 128) * 128
    tp = max(512, min(32768, tp))
    tp = min(tp, _round_up(P, 128))
    p_pad = _round_up(P, tp)
    if p_pad != P:
        # Zero padding: weights are 0 on padded pixels -> zero contribution.
        pad = ((0, 0), (0, 0), (0, p_pad - P))
        inp = jnp.pad(inp, pad)
        tgt = jnp.pad(tgt, pad)
        w = jnp.pad(w, pad)

    return pl.pallas_call(
        _reduce_kernel,
        out_shape=jax.ShapeDtypeStruct((N, C1, C1), jnp.float32),
        grid_spec=pltpu.PrefetchScalarGridSpec(
            num_scalar_prefetch=0,
            grid=(N, p_pad // tp),
            in_specs=[
                pl.BlockSpec((1, C, tp), lambda n, p: (n, 0, p)),
                pl.BlockSpec((1, C, tp), lambda n, p: (n, 0, p)),
                pl.BlockSpec((1, 1, tp), lambda n, p: (n, 0, p)),
            ],
            out_specs=pl.BlockSpec((1, C1, C1), lambda n, p: (n, 0, 0)),
        ),
        compiler_params=pltpu.CompilerParams(
            dimension_semantics=("parallel", "arbitrary"),
            vmem_limit_bytes=48 * 1024 * 1024),
    )(inp, tgt, w)


def weight_multiclass_dice_loss(inp_nchw, tgt_nchw, weights_nhw):
    """Exact forward of WeightMulticlassDiceLoss (weights required, C >= 3)."""
    N, C, H, W = inp_nchw.shape
    if C < 3:
        raise ValueError("WeightMulticlassDiceLoss requires C >= 3 (as in the "
                         "original PyTorch module).")
    P = H * W
    inp = inp_nchw.reshape(N, C, P)
    tgt = tgt_nchw.reshape(N, C, P)
    w = weights_nhw.reshape(N, 1, P)

    aug = dice_reductions(inp, tgt, w)           # (N, C+1, C+1)
    inter = aug[:, :C, :C]                       # (N, C, C)
    sin = aug[:, :C, C]                          # (N, C)  sum_p input*w
    stg = aug[:, C, :C]                          # (N, C)  sum_p target*w

    smooth = 1.0
    # wdice(i, j) = Weight_DiceLoss(input[:, i], target[:, j], weights), for all (i, j).
    dice = 2.0 * (inter + smooth) / (sin[:, :, None] + stg[:, None, :] + smooth)
    wd = 1.0 - jnp.sum(dice, axis=0) / N         # (C, C)

    # Vectorized per-class combination (mirrors the PyTorch branch structure):
    #   i == 0      : 2 * wd[0, 0]
    #   i >= 1      : wd[i, i] + wd[i, jprev] + wd[i, jnext] - 2
    #     jprev = C-1 if i == 1 else i-1 ;  jnext = 1 if i == C-1 else i+1
    ii = jnp.arange(1, C)
    jprev = jnp.where(ii == 1, C - 1, ii - 1)
    jnext = jnp.where(ii == C - 1, 1, ii + 1)
    total = (2.0 * wd[0, 0]
             + jnp.sum(wd[ii, ii] + wd[ii, jprev] + wd[ii, jnext])
             - 2.0 * (C - 1))
    return total / C


def _reference_loss(inp_nchw, tgt_nchw, weights_nhw):
    """Pure-JAX mirror of the PyTorch code for verification."""
    N, C, H, W = inp_nchw.shape
    wf = weights_nhw.reshape(N, -1).astype(jnp.float32)
    smooth = 1.0

    def wdice(i, j):
        xf = inp_nchw[:, i].reshape(N, -1).astype(jnp.float32)
        tf = tgt_nchw[:, j].reshape(N, -1).astype(jnp.float32)
        inter = (xf * tf * wf).sum(1)
        dice = 2.0 * (inter + smooth) / ((xf * wf).sum(1) + (tf * wf).sum(1) + smooth)
        return 1.0 - dice.sum() / N

    total = 0.0
    for i in range(C):
        if i == 0:
            d = wdice(0, 0) * 2.0
        elif i == 1:
            d = wdice(1, 1) - (1.0 - wdice(1, C - 1)) - (1.0 - wdice(1, 2))
        elif i == C - 1:
            d = wdice(i, i) - (1.0 - wdice(i, i - 1)) - (1.0 - wdice(i, 1))
        else:
            d = wdice(i, i) - (1.0 - wdice(i, i - 1)) - (1.0 - wdice(i, i + 1))
        total = total + d
    return total / C


if __name__ == "__main__":
    key = jax.random.PRNGKey(0)
    N, C, H, W = 2, 4, 16, 16
    k1, k2, k3 = jax.random.split(key, 3)

    # input: raw logits/probs (Weight_DiceLoss uses them as-is, no softmax)
    inp = jax.random.uniform(k1, (N, C, H, W), jnp.float32)
    # target: one-hot encoded, channel-first (NCHW), as the module requires
    labels = jax.random.randint(k2, (N, H, W), 0, C)
    tgt = jax.nn.one_hot(labels, C, dtype=jnp.float32).transpose(0, 3, 1, 2)
    # pixel weights
    weights = jax.random.uniform(k3, (N, H, W), jnp.float32)

    loss = jax.block_until_ready(weight_multiclass_dice_loss(inp, tgt, weights))

    ref = _reference_loss(inp, tgt, weights)
    assert jnp.allclose(loss, ref, rtol=1e-5, atol=1e-5), (loss, ref)

    print("KERNEL_OK")
</pallas_src>

<mosaic_0001>
module attributes {stable_mosaic.version = 11 : i64} {
  func.func @_reduce_kernel(%arg0: i32, %arg1: i32, %arg2: memref<1x4x256xf32, #tpu.memory_space<vmem>>, %arg3: memref<1x4x256xf32, #tpu.memory_space<vmem>>, %arg4: memref<1x1x256xf32, #tpu.memory_space<vmem>>, %arg5: memref<1x5x5xf32, #tpu.memory_space<vmem>>) attributes {dimension_semantics = [#tpu.dimension_semantics<parallel>, #tpu.dimension_semantics<arbitrary>], iteration_bounds = array<i64: 2, 1>, scalar_prefetch = 0 : i64, scratch_operands = 0 : i64, tpu.core_type = #tpu.core_type<tc>, window_params = [{transform_indices = @transform_0, window_bounds = array<i64: 1, 4, 256>}, {transform_indices = @transform_1, window_bounds = array<i64: 1, 4, 256>}, {transform_indices = @transform_2, window_bounds = array<i64: 1, 1, 256>}, {transform_indices = @transform_3, window_bounds = array<i64: 1, 5, 5>}]} {
    %c0_i32 = arith.constant 0 : i32
    %0 = arith.cmpi eq, %arg1, %c0_i32 : i32
    %1 = arith.extui %0 : i1 to i32
    %c0_i32_0 = arith.constant 0 : i32
    %2 = arith.cmpi ne, %1, %c0_i32_0 : i32
    scf.if %2 {
      %cst_16 = arith.constant 0.000000e+00 : f32
      %21 = vector.broadcast %cst_16 : f32 to vector<1x5x5xf32>
      %c0_17 = arith.constant 0 : index
      %c0_18 = arith.constant 0 : index
      %c0_19 = arith.constant 0 : index
      %22 = vector.load %arg5[%c0_17, %c0_18, %c0_19] : memref<1x5x5xf32, #tpu.memory_space<vmem>>, vector<1x5x5xf32>
      tpu.vector_store %arg5[%c0_17, %c0_18, %c0_19], %21 {strides = array<i32>} : memref<1x5x5xf32, #tpu.memory_space<vmem>>, vector<1x5x5xf32>,
    } else {
    }
    %c0 = arith.constant 0 : index
    %c0_1 = arith.constant 0 : index
    %c0_2 = arith.constant 0 : index
    %3 = vector.load %arg2[%c0, %c0_1, %c0_2] : memref<1x4x256xf32, #tpu.memory_space<vmem>>, vector<1x4x256xf32>
    %4 = vector.shape_cast %3 : vector<1x4x256xf32> to vector<4x256xf32>
    %c0_3 = arith.constant 0 : index
    %c0_4 = arith.constant 0 : index
    %c0_5 = arith.constant 0 : index
    %5 = vector.load %arg3[%c0_3, %c0_4, %c0_5] : memref<1x4x256xf32, #tpu.memory_space<vmem>>, vector<1x4x256xf32>
    %6 = vector.shape_cast %5 : vector<1x4x256xf32> to vector<4x256xf32>
    %c0_6 = arith.constant 0 : index
    %c0_7 = arith.constant 0 : index
    %c0_8 = arith.constant 0 : index
    %7 = vector.load %arg4[%c0_6, %c0_7, %c0_8] : memref<1x1x256xf32, #tpu.memory_space<vmem>>, vector<1x1x256xf32>
    %8 = vector.shape_cast %7 : vector<1x1x256xf32> to vector<1x256xf32>
    %9 = vector.broadcast %8 : vector<1x256xf32> to vector<4x256xf32>
    %10 = arith.mulf %4, %9 : vector<4x256xf32>
    %cst = arith.constant 1.000000e+00 : f32
    %11 = vector.broadcast %cst : f32 to vector<1x256xf32>
    %12 = tpu.concatenate %10, %8 in 0 : vector<4x256xf32>, vector<1x256xf32> -> vector<5x256xf32>
    %13 = tpu.concatenate %6, %11 in 0 : vector<4x256xf32>, vector<1x256xf32> -> vector<5x256xf32>
    %cst_9 = arith.constant dense<0.000000e+00> : vector<5x5xf32>
    %14 = tpu.matmul %12, %13, %cst_9 {dimension_numbers = #tpu.dot_dimension_numbers<[1], [1], [0], [0], [0, 0, 1, 0], [], []>} : vector<5x256xf32>, vector<5x256xf32>, vector<5x5xf32> -> vector<5x5xf32>
    %c0_10 = arith.constant 0 : index
    %c0_11 = arith.constant 0 : index
    %c0_12 = arith.constant 0 : index
    %15 = vector.load %arg5[%c0_10, %c0_11, %c0_12] : memref<1x5x5xf32, #tpu.memory_space<vmem>>, vector<1x5x5xf32>
    %16 = vector.shape_cast %15 : vector<1x5x5xf32> to vector<5x5xf32>
    %17 = arith.addf %16, %14 : vector<5x5xf32>
    %c0_13 = arith.constant 0 : index
    %c0_14 = arith.constant 0 : index
    %c0_15 = arith.constant 0 : index
    %18 = vector.load %arg5[%c0_13, %c0_14, %c0_15] : memref<1x5x5xf32, #tpu.memory_space<vmem>>, vector<1x5x5xf32>
    %19 = vector.shape_cast %18 : vector<1x5x5xf32> to vector<5x5xf32>
    %20 = vector.shape_cast %17 : vector<5x5xf32> to vector<1x5x5xf32>
    tpu.vector_store %arg5[%c0_13, %c0_14, %c0_15], %20 {strides = array<i32>} : memref<1x5x5xf32, #tpu.memory_space<vmem>>, vector<1x5x5xf32>,
    return
  }
  func.func @transform_0(%arg0: i32, %arg1: i32) -> (i32, i32, i32) {
    %c0_i32 = arith.constant 0 : i32
    %c0_i32_0 = arith.constant 0 : i32
    return %arg0, %c0_i32, %arg1 : i32, i32, i32
  }
  func.func @transform_1(%arg0: i32, %arg1: i32) -> (i32, i32, i32) {
    %c0_i32 = arith.constant 0 : i32
    %c0_i32_0 = arith.constant 0 : i32
    return %arg0, %c0_i32, %arg1 : i32, i32, i32
  }
  func.func @transform_2(%arg0: i32, %arg1: i32) -> (i32, i32, i32) {
    %c0_i32 = arith.constant 0 : i32
    %c0_i32_0 = arith.constant 0 : i32
    return %arg0, %c0_i32, %arg1 : i32, i32, i32
  }
  func.func @transform_3(%arg0: i32, %arg1: i32) -> (i32, i32, i32) {
    %c0_i32 = arith.constant 0 : i32
    %c0_i32_0 = arith.constant 0 : i32
    %c0_i32_1 = arith.constant 0 : i32
    return %arg0, %c0_i32, %c0_i32_0 : i32, i32, i32
  }
}

</mosaic_0001>

<llo_original>
// kernel: tpu_custom_call.1
$region0: #{tpu_custom_call.1}
  #allocation0 [shape = 'u32[]', space=smem, size = 0x4, offset = 0x4, fixed_abs, tag = 'smem constant byte address 0x4 - core index']
  #allocation1 [shape = 'u32[72,128]{1,0:T(1,128)}', space=vmem, size = 0x9000, scoped, tag = 'internal scratch']
  %s0 = inlined_call_operand.hbm [shape: f32[2,4,256], index: 0, kind: input, shape index: {}]
  %s1 = inlined_call_operand.hbm [shape: f32[2,4,256], index: 1, kind: input, shape index: {}]
  %s2 = inlined_call_operand.hbm [shape: f32[2,1,256], index: 2, kind: input, shape index: {}]
  %s3 = inlined_call_operand.vmem [shape: f32[2,5,5], index: 3, kind: output, shape index: {}]
  %s4 = sld [smem:[#allocation0]]
  $region61: #{tpu_custom_call.1} parent=0
    _
  %s6 = ssub.s32 1, %s4
  %s7 = scalar_select 0, %s6, %s4
  $region1: #{tpu_custom_call.1} parent=0
    #allocation2 [shape = 'u8[8192]{0}', space=vmem, size = 0x2000, scoped, tag = 'input window, operand 0']
    #allocation3 [shape = 's32[2]{0}', space=sflag, size = 0x8, scoped, tag = 'scoped memory for tpu_custom_call.1']
    #allocation4 [shape = 'u8[8192]{0}', space=vmem, size = 0x2000, scoped, tag = 'input window, operand 1']
    #allocation5 [shape = 's32[2]{0}', space=sflag, size = 0x8, scoped, tag = 'scoped memory for tpu_custom_call.1']
    #allocation6 [shape = 'u8[2048]{0}', space=vmem, size = 0x800, scoped, tag = 'input window, operand 2']
    %8 = vsyncpa [#allocation3], 0
    %s9 = scalar_lea.sflag [#allocation3], 1
    %10 = vsyncpa %s9, 0
    %11 = vsyncpa [#allocation5], 0
    %s12 = scalar_lea.sflag [#allocation5], 1
    %13 = vsyncpa %s12, 0
    loop: start=0, step=1, limit=4
    $region2: #{tpu_custom_call.1} parent=1 // loop_pre_header
      _
    $region3: #{tpu_custom_call.1} parent=1 // loop_header
      %s15 = sphi 0, %s19
      %p16 = scmp.ge.s32.totalorder %s15, 4
      %s22 = sphi 0, %s34
      %s23 = sphi 0, %s30
      %s24 = sphi 0, %s22
      %s25 = sphi 0, %s23
      %s26 = sphi 0, %s24
      %s27 = sphi 0, %s25
      %s39 = sphi 0, %s41
      %s42 = sphi 0, %s39
      %s43 = sphi 0, %s42
      %s59 = sphi 0, %s43
      %s67 = sphi 0, %s69
      %s70 = sphi 0, %s67
      %s71 = sphi 0, %s70
      %s87 = sphi 0, %s71
      %s95 = sphi 0, %s97
      %s98 = sphi 0, %s95
      %s99 = sphi 0, %s98
      %s115 = sphi 0, %s99
      %s121 = sphi 0, %s123
      %s124 = sphi 0, %s121
      %s125 = sphi 0, %s124
      %s141 = sphi 0, %s125
    $region4: #{tpu_custom_call.1} parent=1 // loop_header_branch
      %18 = sbr.rel (%p16) target = $region8
    $region5: #{tpu_custom_call.1} parent=1 // loop_body
      %s20 = ssub.s32 %s15, 1
      %s21 = ssub.s32 %s15, 2
      %s28 = sadd.s32 1, %s23
      %p29 = scmp.ge.s32.totalorder %s28, 1
      %s30 = scalar_select %p29, 0, %s28
      %s31 = sadd.s32 1, %s22
      %s32 = scalar_select %p29, %s31, %s22
      %p33 = scmp.ge.s32.totalorder %s32, 2
      %s34 = scalar_select %p33, 0, %s32
      %s35 = ssub.s32 %s22, %s34
      %s36 = ssub.s32 %s23, %s30
      %s37 = sor.u32 %s35, %s36
      %p38 = scmp.eq.s32.totalorder %s37, 0
      %s40 = sadd.s32 %s39, 1
      %s41 = scalar_select %p38, %s39, %s40
      %p44 = pneg %p38
      %p45 = scmp.eq.s32.totalorder %s15, 1
      %p46 = por %p44, %p45
      %p47 = scmp.ne.s32.totalorder %s39, %s42
      %p48 = scmp.eq.s32.totalorder %s15, 0
      %p49 = por %p47, %p48
      %p50 = scmp.ne.s32.totalorder %s39, %s42
      %p51 = scmp.eq.s32.totalorder %s20, 1
      %p52 = por %p50, %p51
      %p53 = scmp.ne.s32.totalorder %s42, %s43
      %p54 = scmp.eq.s32.totalorder %s20, 0
      %p55 = por %p53, %p54
      %p56 = scmp.ne.s32.totalorder %s42, %s43
      %p57 = scmp.eq.s32.totalorder %s21, 1
      %p58 = por %p56, %p57
      %p60 = scmp.ne.s32.totalorder %s43, %s59
      %p61 = scmp.eq.s32.totalorder %s21, 0
      %p62 = por %p60, %p61
      %s63 = ssub.s32 %s22, %s34
      %s64 = ssub.s32 %s23, %s30
      %s65 = sor.u32 %s63, %s64
      %p66 = scmp.eq.s32.totalorder %s65, 0
      %s68 = sadd.s32 %s67, 1
      %s69 = scalar_select %p66, %s67, %s68
      %p72 = pneg %p66
      %p73 = scmp.eq.s32.totalorder %s15, 1
      %p74 = por %p72, %p73
      %p75 = scmp.ne.s32.totalorder %s67, %s70
      %p76 = scmp.eq.s32.totalorder %s15, 0
      %p77 = por %p75, %p76
      %p78 = scmp.ne.s32.totalorder %s67, %s70
      %p79 = scmp.eq.s32.totalorder %s20, 1
      %p80 = por %p78, %p79
      %p81 = scmp.ne.s32.totalorder %s70, %s71
      %p82 = scmp.eq.s32.totalorder %s20, 0
      %p83 = por %p81, %p82
      %p84 = scmp.ne.s32.totalorder %s70, %s71
      %p85 = scmp.eq.s32.totalorder %s21, 1
      %p86 = por %p84, %p85
      %p88 = scmp.ne.s32.totalorder %s71, %s87
      %p89 = scmp.eq.s32.totalorder %s21, 0
      %p90 = por %p88, %p89
      %s91 = ssub.s32 %s22, %s34
      %s92 = ssub.s32 %s23, %s30
      %s93 = sor.u32 %s91, %s92
      %p94 = scmp.eq.s32.totalorder %s93, 0
      %s96 = sadd.s32 %s95, 1
      %s97 = scalar_select %p94, %s95, %s96
      %p100 = pneg %p94
      %p101 = scmp.eq.s32.totalorder %s15, 1
      %p102 = por %p100, %p101
      %p103 = scmp.ne.s32.totalorder %s95, %s98
      %p104 = scmp.eq.s32.totalorder %s15, 0
      %p105 = por %p103, %p104
      %p106 = scmp.ne.s32.totalorder %s95, %s98
      %p107 = scmp.eq.s32.totalorder %s20, 1
      %p108 = por %p106, %p107
      %p109 = scmp.ne.s32.totalorder %s98, %s99
      %p110 = scmp.eq.s32.totalorder %s20, 0
      %p111 = por %p109, %p110
      %p112 = scmp.ne.s32.totalorder %s98, %s99
      %p113 = scmp.eq.s32.totalorder %s21, 1
      %p114 = por %p112, %p113
      %p116 = scmp.ne.s32.totalorder %s99, %s115
      %p117 = scmp.eq.s32.totalorder %s21, 0
      %p118 = por %p116, %p117
      %s119 = ssub.s32 %s22, %s34
      %p120 = scmp.eq.s32.totalorder %s119, 0
      %s122 = sadd.s32 %s121, 1
      %s123 = scalar_select %p120, %s121, %s122
      %p126 = pneg %p120
      %p127 = scmp.eq.s32.totalorder %s15, 1
      %p128 = por %p126, %p127
      %p129 = scmp.ne.s32.totalorder %s121, %s124
      %p130 = scmp.eq.s32.totalorder %s15, 0
      %p131 = por %p129, %p130
      %p132 = scmp.ne.s32.totalorder %s121, %s124
      %p133 = scmp.eq.s32.totalorder %s20, 1
      %p134 = por %p132, %p133
      %p135 = scmp.ne.s32.totalorder %s124, %s125
      %p136 = scmp.eq.s32.totalorder %s20, 0
      %p137 = por %p135, %p136
      %p138 = scmp.ne.s32.totalorder %s124, %s125
      %p139 = scmp.eq.s32.totalorder %s21, 1
      %p140 = por %p138, %p139
      %p142 = scmp.ne.s32.totalorder %s125, %s141
      %p143 = scmp.eq.s32.totalorder %s21, 0
      %p144 = por %p142, %p143
      %p145 = scmp.le.s32.totalorder 1, %s15
      %p146 = scmp.lt.s32.totalorder %s15, 3
      %p147 = pnand %p145, %p146
      %p148 = pneg %p147
      // Predicated region
      $region9: #{tpu_custom_call.1} parent=5 // pred_check
        _
      $region10: #{tpu_custom_call.1} parent=5 // pred_check_branch
        %150 = sbr.rel (%p147) target = $region12
      $region11: #{tpu_custom_call.1} parent=5 // pred_region
        %s151 = ssub.s32 %s15, 1
      $region12: #{tpu_custom_call.1} parent=5 // pred_fallthru
        _
      %p152 = scmp.lt.s32.totalorder %s15, 2
      // Predicated region
      $region13: #{tpu_custom_call.1} parent=5 // pred_check
        %p153 = pneg %p152
      $region14: #{tpu_custom_call.1} parent=5 // pred_check_branch
        %155 = sbr.rel (%p153) target = $region16
      $region15: #{tpu_custom_call.1} parent=5 // pred_region
        // Predicated region
        $region17: #{tpu_custom_call.1} parent=15 // pred_check
          %p156 = pneg %p49
        $region18: #{tpu_custom_call.1} parent=15 // pred_check_branch
          %158 = sbr.rel (%p156) target = $region20
        $region19: #{tpu_custom_call.1} parent=15 // pred_region
          %s159 = sand.u32 %s39, 1
          %s160 = scalar_lea.sflag [#allocation3], %s159
          %s161 = sand.u32 %s39, 1
          %s162 = smul.addr %s161, 8
          %s163 = scalar_lea.vmem [#allocation2], %s162
          %s164 = smul.u32 2, %s23
          %166 = vsyncadd %s160, 0
          %s167 = smul.addr %s22, 2
          %s168 = sadd.s32 %s164, %s167
          %s169 = smul.addr %s168, 4
          %s170 = scalar_lea.hbm %s0, %s169
          %s172 = sshll.u32 %s170, 4
          %s173 = int_to_ptr.hbm [resolvable:$true] %s172
          %s174 = sshll.u32 %s163, 4
          %s175 = int_to_ptr.vmem [resolvable:$true] %s174
          %177 = dma.hbm_to_vmem [thread:$0]  %s173, 128, %s175, %s160
        $region20: #{tpu_custom_call.1} parent=15 // pred_fallthru
          _
        // Predicated region
        $region21: #{tpu_custom_call.1} parent=15 // pred_check
          %p178 = pneg %p77
        $region22: #{tpu_custom_call.1} parent=15 // pred_check_branch
          %180 = sbr.rel (%p178) target = $region24
        $region23: #{tpu_custom_call.1} parent=15 // pred_region
          %s181 = sand.u32 %s15, 1
          %s182 = scalar_lea.sflag [#allocation5], %s181
          %s183 = sand.u32 %s67, 1
          %s184 = smul.addr %s183, 8
          %s185 = scalar_lea.vmem [#allocation4], %s184
          %s186 = smul.u32 2, %s23
          %188 = vsyncadd %s182, 0
          %s189 = smul.addr %s22, 2
          %s190 = sadd.s32 %s186, %s189
          %s191 = smul.addr %s190, 4
          %s192 = scalar_lea.hbm %s1, %s191
          %s194 = sshll.u32 %s192, 4
          %s195 = int_to_ptr.hbm [resolvable:$true] %s194
          %s196 = sshll.u32 %s185, 4
          %s197 = int_to_ptr.vmem [resolvable:$true] %s196
          %199 = dma.hbm_to_vmem [thread:$0]  %s195, 128, %s197, %s182
        $region24: #{tpu_custom_call.1} parent=15 // pred_fallthru
          _
        // Predicated region
        $region25: #{tpu_custom_call.1} parent=15 // pred_check
          %p200 = pneg %p105
        $region26: #{tpu_custom_call.1} parent=15 // pred_check_branch
          %202 = sbr.rel (%p200) target = $region28
        $region27: #{tpu_custom_call.1} parent=15 // pred_region
          %s203 = sand.u32 %s15, 1
          %s204 = scalar_lea.sflag [#allocation5], %s203
          %s205 = sand.u32 %s95, 1
          %s206 = smul.addr %s205, 2
          %s207 = scalar_lea.vmem [#allocation6], %s206
          %s208 = smul.u32 2, %s23
          %210 = vsyncadd %s204, 0
          %s211 = smul.addr %s22, 2
          %s212 = sadd.s32 %s208, %s211
          %s213 = scalar_lea.hbm %s2, %s212
          %s215 = sshll.u32 %s213, 4
          %s216 = int_to_ptr.hbm [resolvable:$true] %s215
          %s217 = sshll.u32 %s207, 4
          %s218 = int_to_ptr.vmem [resolvable:$true] %s217
          %220 = dma.hbm_to_vmem [thread:$0]  %s216, 32, %s218, %s204
        $region28: #{tpu_custom_call.1} parent=15 // pred_fallthru
          _
      $region16: #{tpu_custom_call.1} parent=5 // pred_fallthru
        _
      %p221 = scmp.le.s32.totalorder 1, %s15
      %p222 = scmp.lt.s32.totalorder %s15, 3
      %p223 = pnand %p221, %p222
      %p224 = pneg %p223
      // Predicated region
      $region29: #{tpu_custom_call.1} parent=5 // pred_check
        _
      $region30: #{tpu_custom_call.1} parent=5 // pred_check_branch
        %226 = sbr.rel (%p223) target = $region32
      $region31: #{tpu_custom_call.1} parent=5 // pred_region
        %s227 = ssub.s32 %s15, 1
        %s228 = sand.u32 %s42, 1
        %s229 = scalar_lea.sflag [#allocation3], %s228
        %s230 = sand.u32 %s42, 1
        %s231 = smul.addr %s230, 8
        %s232 = scalar_lea.vmem [#allocation2], %s231
        // Predicated region
        $region33: #{tpu_custom_call.1} parent=31 // pred_check
          %p233 = pneg %p55
        $region34: #{tpu_custom_call.1} parent=31 // pred_check_branch
          %235 = sbr.rel (%p233) target = $region36
        $region35: #{tpu_custom_call.1} parent=31 // pred_region
          %237 = dma.done %s229, 128
        $region36: #{tpu_custom_call.1} parent=31 // pred_fallthru
          _
        %s238 = sand.u32 %s20, 1
        %s239 = scalar_lea.sflag [#allocation5], %s238
        %s240 = sand.u32 %s70, 1
        %s241 = smul.addr %s240, 8
        %s242 = scalar_lea.vmem [#allocation4], %s241
        // Predicated region
        $region37: #{tpu_custom_call.1} parent=31 // pred_check
          %p243 = pneg %p83
        $region38: #{tpu_custom_call.1} parent=31 // pred_check_branch
          %245 = sbr.rel (%p243) target = $region40
        $region39: #{tpu_custom_call.1} parent=31 // pred_region
          %247 = dma.done %s239, 128
        $region40: #{tpu_custom_call.1} parent=31 // pred_fallthru
          _
        %s248 = sand.u32 %s20, 1
        %s249 = scalar_lea.sflag [#allocation5], %s248
        %s250 = sand.u32 %s98, 1
        %s251 = smul.addr %s250, 2
        %s252 = scalar_lea.vmem [#allocation6], %s251
        // Predicated region
        $region41: #{tpu_custom_call.1} parent=31 // pred_check
          %p253 = pneg %p111
        $region42: #{tpu_custom_call.1} parent=31 // pred_check_branch
          %255 = sbr.rel (%p253) target = $region44
        $region43: #{tpu_custom_call.1} parent=31 // pred_region
          %257 = dma.done %s249, 32
        $region44: #{tpu_custom_call.1} parent=31 // pred_fallthru
          _
        %s258 = sand.u32 %s42, 1
        %s259 = scalar_lea.sflag [#allocation3], %s258
        %s260 = sand.u32 %s42, 1
        %s261 = smul.addr %s260, 8
        %s262 = scalar_lea.vmem [#allocation2], %s261
        %p263 = pneg %p55
        %p264 = pneg %p52
        %s265 = sand.u32 %s20, 1
        %s266 = scalar_lea.sflag [#allocation5], %s265
        %s267 = sand.u32 %s70, 1
        %s268 = smul.addr %s267, 8
        %s269 = scalar_lea.vmem [#allocation4], %s268
        %p270 = pneg %p83
        %p271 = pneg %p80
        %s272 = sand.u32 %s20, 1
        %s273 = scalar_lea.sflag [#allocation5], %s272
        %s274 = sand.u32 %s98, 1
        %s275 = smul.addr %s274, 2
        %s276 = scalar_lea.vmem [#allocation6], %s275
        %p277 = pneg %p111
        %p278 = pneg %p108
        %p279 = pneg %p137
        %p280 = pneg %p134
        %p281 = scmp.lt.s32.totalorder %s24, 1
        %s282 = scalar_select %p281, %s24, 1
        %s283 = smul.addr %s282, 8
        %s284 = scalar_lea.vmem %s3, %s283
        %s285 = smul.u32 2, %s25
        %s286 = smul.u32 2, %s25
        %s287 = smul.u32 2, %s25
        %p288 = scmp.lt.s32.totalorder %s24, 1
        %s289 = scalar_select %p288, %s24, 1
        %s290 = smul.addr %s289, 8
        %s291 = scalar_lea.vmem %s3, %s290
        %p292 = scmp.eq.s32.totalorder %s25, 0
        // Predicated region
        $region45: #{tpu_custom_call.1} parent=31 // pred_check
          %p293 = pneg %p292
        $region46: #{tpu_custom_call.1} parent=31 // pred_check_branch
          %295 = sbr.rel (%p293) target = $region48
        $region47: #{tpu_custom_call.1} parent=31 // pred_region
          %vm296 = vcmask 36864
          %297 = vst.msk [vmem:[%s291] sm:$0x1f] %vm296, 0.0
        $region48: #{tpu_custom_call.1} parent=31 // pred_fallthru
          _
        %v298 = vld [vmem:[%s232] sm:$0xff]
        %v299 = vld [vmem:[%s242] sm:$0xff]
        %v300 = vld [vmem:[%s252] sm:$0x3]
        %v302 = vperm.slane %v300, 0
        %v303 = vperm.slane %v300, 1
        %v304 = vrot.slane %v303, 4
        %vm305 = vcmask 1043456
        %v306 = vsel %vm305, %v302, %v304
        %v308 = vmul.f32 %v298, %v306
        %310 = vst [vmem:[#allocation1] ss:$2 sm:$0xff] %v308
        %v311 = vld.sshfl [vmem:[#allocation1] sm:$0xff pattern:$0x75316420]
        %v312 = vld.sshfl [vmem:[#allocation1 + $0x8] sm:$0xff pattern:$0x75316420]
        %v317 = vsel %vm305, %v311, %v302
        %v318 = vsel %vm305, %v312, %v303
        %320 = vst [vmem:[#allocation1] ss:$2 sm:$0xff] %v299
        %v321 = vld.sshfl [vmem:[#allocation1] sm:$0xff pattern:$0x75316420]
        %v322 = vld.sshfl [vmem:[#allocation1 + $0x8] sm:$0xff pattern:$0x75316420]
        %v325 = vsel %vm305, %v321, 1.0
        %v326 = vsel %vm305, %v322, 1.0
        %327 = vmatpush.xpose.msra.mxu0 0.0
        %328 = vmatpush.xpose.msra.mxu0 0.0
        %329 = vmatpush.xpose.msra.mxu0 0.0
        %330 = vmatpush.xpose.msra.mxu0 0.0
        %331 = vmatpush.xpose.msra.mxu0 0.0
        %332 = vmatpush.xpose.msra.mxu0 0.0
        %333 = vmatpush.xpose.msra.mxu0 0.0
        %334 = vmatpush.xpose.msra.mxu0 0.0
        %335 = vmatpush.xpose.msra.mxu0 0.0
        %336 = vmatpush.xpose.msra.mxu0 0.0
        %337 = vmatpush.xpose.msra.mxu0 0.0
        %338 = vmatpush.xpose.msra.mxu0 0.0
        %339 = vmatpush.xpose.msra.mxu0 0.0
        %340 = vmatpush.xpose.msra.mxu0 0.0
        %341 = vmatpush.xpose.msra.mxu0 0.0
        %342 = vmatpush.xpose.msra.mxu0 %v325
        %343 = vmatmul.f32.gmra.mxu0 %v317
        %v344 = vpop.f32.mrf.mxu0
        %v345 = vadd.f32 0.0, %v344
        %346 = vdwg.mxu0
        %347 = vmatpush.xpose.msra.mxu0 0.0
        %348 = vmatpush.xpose.msra.mxu0 0.0
        %349 = vmatpush.xpose.msra.mxu0 0.0
        %350 = vmatpush.xpose.msra.mxu0 0.0
        %351 = vmatpush.xpose.msra.mxu0 0.0
        %352 = vmatpush.xpose.msra.mxu0 0.0
        %353 = vmatpush.xpose.msra.mxu0 0.0
        %354 = vmatpush.xpose.msra.mxu0 0.0
        %355 = vmatpush.xpose.msra.mxu0 0.0
        %356 = vmatpush.xpose.msra.mxu0 0.0
        %357 = vmatpush.xpose.msra.mxu0 0.0
        %358 = vmatpush.xpose.msra.mxu0 0.0
        %359 = vmatpush.xpose.msra.mxu0 0.0
        %360 = vmatpush.xpose.msra.mxu0 0.0
        %361 = vmatpush.xpose.msra.mxu0 0.0
        %362 = vmatpush.xpose.msra.mxu0 %v326
        %363 = vmatmul.f32.gmra.mxu0 %v318
        %v364 = vpop.f32.mrf.mxu0
        %v365 = vadd.f32 %v345, %v364
        %366 = vdwg.mxu0
        %v367 = vld [vmem:[%s291] sm:$0x1f]
        %v368 = vadd.f32 %v367, %v365
        %vm369 = vcmask 36864
        %370 = vst.msk [vmem:[%s291] sm:$0x1f] %vm369, %v368
        %p371 = scmp.lt.s32.totalorder %s24, 1
        %s372 = scalar_select %p371, %s24, 1
        %s373 = smul.addr %s372, 8
        %s374 = scalar_lea.vmem %s3, %s373
        // Predicated region
        $region49: #{tpu_custom_call.1} parent=31 // pred_check
          %p375 = pneg %p134
        $region50: #{tpu_custom_call.1} parent=31 // pred_check_branch
          %377 = sbr.rel (%p375) target = $region52
        $region51: #{tpu_custom_call.1} parent=31 // pred_region
          _
        $region52: #{tpu_custom_call.1} parent=31 // pred_fallthru
          _
      $region32: #{tpu_custom_call.1} parent=5 // pred_fallthru
        _
      %p378 = scmp.le.s32.totalorder 2, %s15
      // Predicated region
      $region53: #{tpu_custom_call.1} parent=5 // pred_check
        %p379 = pneg %p378
      $region54: #{tpu_custom_call.1} parent=5 // pred_check_branch
        %381 = sbr.rel (%p379) target = $region56
      $region55: #{tpu_custom_call.1} parent=5 // pred_region
        %s382 = ssub.s32 %s15, 2
        // Predicated region
        $region57: #{tpu_custom_call.1} parent=55 // pred_check
          %p383 = pneg %p140
        $region58: #{tpu_custom_call.1} parent=55 // pred_check_branch
          %385 = sbr.rel (%p383) target = $region60
        $region59: #{tpu_custom_call.1} parent=55 // pred_region
          %p386 = scmp.lt.s32.totalorder %s26, 1
          %s387 = scalar_select %p386, %s26, 1
          %s388 = smul.addr %s387, 8
          %s389 = scalar_lea.vmem %s3, %s388
        $region60: #{tpu_custom_call.1} parent=55 // pred_fallthru
          _
      $region56: #{tpu_custom_call.1} parent=5 // pred_fallthru
        _
    $region6: #{tpu_custom_call.1} parent=1 // loop_footer
      %s19 = sadd.s32 1, %s15
    $region7: #{tpu_custom_call.1} parent=1 // loop_footer_branch
      %14 = sbr.rel target = $region3
    $region8: #{tpu_custom_call.1} parent=1 // loop_exit
      _
    %390 = vsyncpa [#allocation3], 1
    %s391 = scalar_lea.sflag [#allocation3], 1
    %392 = vsyncpa %s391, 1
    %393 = vsyncpa [#allocation5], 1
    %s394 = scalar_lea.sflag [#allocation5], 1
    %395 = vsyncpa %s394, 1

</llo_original>
